<compile_context>
chip_gen: v7x
topology: tpu7x:2x2x1
jax: 0.10.0
libtpu: 0.0.40
codegen_flags: <defaults>
</compile_context>

<pallas_src>
import functools

import jax
import jax.numpy as jnp
from jax.experimental import pallas as pl
from jax.experimental.pallas import tpu as pltpu


def _gelu_tanh(x):
    # PyTorch nn.functional.gelu(..., approximate='tanh'), computed in f32.
    c = jnp.float32(0.7978845608028654)  # sqrt(2/pi)
    return 0.5 * x * (1.0 + jnp.tanh(c * (x + 0.044715 * x * x * x)))


def _round_up(n, m):
    return int(pl.cdiv(int(n), int(m))) * int(m)


def _vmem_budget_bytes():
    """Generation-aware per-core VMEM budget (leave Mosaic headroom)."""
    try:
        cap = int(pltpu.get_tpu_info().vmem_capacity_bytes)
    except Exception:  # query unavailable -> most conservative assumption
        cap = 64 << 20
    # ~40 MiB on v7x (64 MiB physical / TC), 64 MiB on v5e / v6e (128 MiB).
    return min((cap * 5) // 8, 64 << 20)


def _pick_tm(M, H, I_pad, x_bytes, c_bytes, out_bytes, ti, budget):
    """Largest token tile whose working set fits next to the resident weights."""
    resident = 2 * H * I_pad * c_bytes + (I_pad + H) * 4  # W1+W2 + f32 biases
    tm_cap = _round_up(M, 8)
    for cand in (1024, 512, 256, 128, 64, 32, 16, 8):
        tm = min(cand, tm_cap)
        need = (resident
                + 2 * tm * H * x_bytes      # x tile (double-buffered)
                + 2 * tm * H * out_bytes    # out tile (double-buffered)
                + tm * H * 4                # f32 accumulator
                + 2 * tm * ti * 4)          # fc1 slab temp (f32) + slack
        if need <= budget:
            return tm
    # TODO(synk): fall back to streaming W1/W2 over a reduction grid axis if
    # the resident weights themselves do not fit the VMEM budget.
    return min(8, tm_cap)


def siglip_mlp_kernel(x_ref, w1_ref, b1_ref, w2_ref, b2_ref, o_ref, *, ti):
    # x_ref : (tm, H)      input dtype (cast to the MXU dtype below)
    # w1_ref: (H, I_pad)   compute dtype, VMEM-resident across the whole grid
    # b1_ref: (1, I_pad)   f32,           VMEM-resident
    # w2_ref: (I_pad, H)   compute dtype, VMEM-resident
    # b2_ref: (1, H)       f32,           VMEM-resident
    # o_ref : (tm, H)      output dtype
    tm = x_ref.shape[0]
    H = o_ref.shape[1]
    I_pad = w1_ref.shape[1]
    n_slabs = I_pad // ti
    cdtype = w1_ref.dtype

    # Cast the token tile once (hoisted out of the reduction loop).
    x = x_ref[...].astype(cdtype)

    acc = jnp.zeros((tm, H), jnp.float32)
    # Statically unrolled reduction over 128-aligned slabs of the resident
    # weights: fc1 slab -> bias -> gelu(tanh) -> fc2 slab, f32 accumulation.
    for s in range(n_slabs):
        lo, hi = s * ti, (s + 1) * ti
        w1s = w1_ref[:, lo:hi]
        b1s = b1_ref[:, lo:hi]
        w2s = w2_ref[lo:hi, :]
        h = jnp.dot(x, w1s, preferred_element_type=jnp.float32)
        h = _gelu_tanh(h + b1s)
        acc = acc + jnp.dot(h.astype(cdtype), w2s,
                            preferred_element_type=jnp.float32)

    # Fused bias add + store: single lane-dense (tm, H) write, no scratch.
    o_ref[...] = (acc + b2_ref[...]).astype(o_ref.dtype)


@functools.partial(jax.jit, static_argnames=("tm", "ti", "compute_dtype"))
def siglip_mlp(x, w1, b1, w2, b2, *, tm=None, ti=512,
               compute_dtype=jnp.bfloat16):
    """SiglipMLP forward. x: [B, S, H]; weights stored as [in, out]."""
    B, S, H = x.shape
    I = w1.shape[1]
    M = B * S

    out_dtype = x.dtype
    x_bytes = jnp.dtype(x.dtype).itemsize
    c_bytes = jnp.dtype(compute_dtype).itemsize
    o_bytes = jnp.dtype(out_dtype).itemsize

    # Slab width: 128-lane multiple, never larger than the (padded) I.
    ti_eff = max(128, (int(ti) // 128) * 128)
    ti_eff = min(ti_eff, _round_up(I, 128))
    I_pad = _round_up(I, ti_eff)

    budget = _vmem_budget_bytes()
    if tm is None:
        tm_eff = _pick_tm(M, H, I_pad, x_bytes, c_bytes, o_bytes, ti_eff, budget)
    else:
        tm_eff = min(int(tm), _round_up(M, 8))
    M_pad = _round_up(M, tm_eff)

    # x stays in its original dtype (cast per tile inside the kernel); pad
    # tokens only if needed.  Weights should already be `compute_dtype`
    # upstream so these casts are no-ops on the hot path.
    x2 = x.reshape(M, H)
    if M_pad != M:
        x2 = jnp.pad(x2, ((0, M_pad - M), (0, 0)))
    w1c = w1.astype(compute_dtype)
    w2c = w2.astype(compute_dtype)
    b1_2 = b1.reshape(1, I).astype(jnp.float32)
    b2_2 = b2.reshape(1, H).astype(jnp.float32)
    if I_pad != I:
        # Zero-padded fc1 columns produce gelu(0 + 0) = 0 activations that hit
        # zero fc2 rows -> output unchanged.
        w1c = jnp.pad(w1c, ((0, 0), (0, I_pad - I)))
        w2c = jnp.pad(w2c, ((0, I_pad - I), (0, 0)))
        b1_2 = jnp.pad(b1_2, ((0, 0), (0, I_pad - I)))

    grid = (M_pad // tm_eff,)

    cost = pl.CostEstimate(
        flops=4 * M_pad * H * I_pad,               # two matmuls, 2*M*N*K each
        transcendentals=M_pad * I_pad,             # tanh inside gelu
        bytes_accessed=(M_pad * H * x_bytes        # x (read once)
                        + 2 * H * I_pad * c_bytes  # W1 + W2 (resident: once)
                        + (I_pad + H) * 4          # biases (f32)
                        + M_pad * H * o_bytes),    # output
    )

    out = pl.pallas_call(
        functools.partial(siglip_mlp_kernel, ti=ti_eff),
        out_shape=jax.ShapeDtypeStruct((M_pad, H), out_dtype),
        grid_spec=pltpu.PrefetchScalarGridSpec(
            num_scalar_prefetch=0,
            grid=grid,
            in_specs=[
                pl.BlockSpec((tm_eff, H), lambda i: (i, 0)),  # x token tile
                pl.BlockSpec((H, I_pad), lambda i: (0, 0)),   # W1 (resident)
                pl.BlockSpec((1, I_pad), lambda i: (0, 0)),   # b1 (resident)
                pl.BlockSpec((I_pad, H), lambda i: (0, 0)),   # W2 (resident)
                pl.BlockSpec((1, H), lambda i: (0, 0)),       # b2 (resident)
            ],
            out_specs=pl.BlockSpec((tm_eff, H), lambda i: (i, 0)),
        ),
        compiler_params=pltpu.CompilerParams(
            dimension_semantics=("parallel",),      # shard token tiles on megacore
            vmem_limit_bytes=int(budget),
        ),
        cost_estimate=cost,
    )(x2, w1c, b1_2, w2c, b2_2)

    return out[:M].reshape(B, S, H)


def _reference(x, w1, b1, w2, b2):
    h = x @ w1 + b1.reshape(1, -1)
    h = _gelu_tanh(h)
    return h @ w2 + b2.reshape(1, -1)


if __name__ == "__main__":
    # Toy config: hidden_size=32, intermediate_size=64; batch=2, seq=8.
    # (Real SigLIP sizes H=768/1152, I=3072/4304 use the same code path with
    #  the 512-wide slab tiling and I zero-padding kicking in automatically.)
    B, S, H, I = 2, 8, 32, 64

    key = jax.random.PRNGKey(0)
    kx, kw1, kb1, kw2, kb2 = jax.random.split(key, 5)

    x = jax.random.normal(kx, (B, S, H), dtype=jnp.float32)
    # nn.Linear-shaped params stored transposed as [in, out] for row-major matmul.
    w1 = jax.random.normal(kw1, (H, I), dtype=jnp.float32) * 0.05
    b1 = jax.random.normal(kb1, (I,), dtype=jnp.float32) * 0.02
    w2 = jax.random.normal(kw2, (I, H), dtype=jnp.float32) * 0.05
    b2 = jax.random.normal(kb2, (H,), dtype=jnp.float32) * 0.02

    y_ref = _reference(x, w1, b1, w2, b2)

    # f32 compute path.
    y_f32 = jax.block_until_ready(
        siglip_mlp(x, w1, b1, w2, b2, compute_dtype=jnp.float32))
    assert y_f32.shape == (B, S, H)
    assert jnp.allclose(y_f32, y_ref, atol=2e-3, rtol=2e-3), "f32 mismatch"

    # Default bf16 compute path (MXU dtype, f32 accumulation): looser tolerance.
    y_bf16 = jax.block_until_ready(siglip_mlp(x, w1, b1, w2, b2))
    assert y_bf16.shape == (B, S, H)
    assert jnp.allclose(y_bf16, y_ref, atol=2e-2, rtol=2e-2), "bf16 mismatch"

    print("KERNEL_OK")
</pallas_src>

<mosaic_0001>
module attributes {stable_mosaic.version = 11 : i64} {
  func.func @siglip_mlp_kernel(%arg0: i32, %arg1: memref<16x32xf32, #tpu.memory_space<vmem>>, %arg2: memref<32x128xf32, #tpu.memory_space<vmem>>, %arg3: memref<1x128xf32, #tpu.memory_space<vmem>>, %arg4: memref<128x32xf32, #tpu.memory_space<vmem>>, %arg5: memref<1x32xf32, #tpu.memory_space<vmem>>, %arg6: memref<16x32xf32, #tpu.memory_space<vmem>>) attributes {dimension_semantics = [#tpu.dimension_semantics<parallel>], iteration_bounds = array<i64: 1>, scalar_prefetch = 0 : i64, scratch_operands = 0 : i64, tpu.core_type = #tpu.core_type<tc>, window_params = [{transform_indices = @transform_0, window_bounds = array<i64: 16, 32>}, {pipeline_mode = #tpu.pipeline_mode<synchronous>, transform_indices = @transform_1, window_bounds = array<i64: 32, 128>}, {pipeline_mode = #tpu.pipeline_mode<synchronous>, transform_indices = @transform_2, window_bounds = array<i64: 1, 128>}, {pipeline_mode = #tpu.pipeline_mode<synchronous>, transform_indices = @transform_3, window_bounds = array<i64: 128, 32>}, {pipeline_mode = #tpu.pipeline_mode<synchronous>, transform_indices = @transform_4, window_bounds = array<i64: 1, 32>}, {transform_indices = @transform_5, window_bounds = array<i64: 16, 32>}]} {
    %c0 = arith.constant 0 : index
    %c0_0 = arith.constant 0 : index
    %0 = vector.load %arg1[%c0, %c0_0] : memref<16x32xf32, #tpu.memory_space<vmem>>, vector<16x32xf32>
    %cst = arith.constant 0.000000e+00 : f32
    %1 = vector.broadcast %cst : f32 to vector<16x32xf32>
    %c0_1 = arith.constant 0 : index
    %c0_2 = arith.constant 0 : index
    %2 = vector.load %arg2[%c0_1, %c0_2] : memref<32x128xf32, #tpu.memory_space<vmem>>, vector<32x128xf32>
    %c0_3 = arith.constant 0 : index
    %c0_4 = arith.constant 0 : index
    %3 = vector.load %arg3[%c0_3, %c0_4] : memref<1x128xf32, #tpu.memory_space<vmem>>, vector<1x128xf32>
    %c0_5 = arith.constant 0 : index
    %c0_6 = arith.constant 0 : index
    %4 = vector.load %arg4[%c0_5, %c0_6] : memref<128x32xf32, #tpu.memory_space<vmem>>, vector<128x32xf32>
    %cst_7 = arith.constant dense<0.000000e+00> : vector<16x128xf32>
    %5 = tpu.matmul %0, %2, %cst_7 {dimension_numbers = #tpu.dot_dimension_numbers<[1], [0], [0], [1], [0, 0, 1, 1], [], []>} : vector<16x32xf32>, vector<32x128xf32>, vector<16x128xf32> -> vector<16x128xf32>
    %6 = vector.broadcast %3 : vector<1x128xf32> to vector<16x128xf32>
    %7 = arith.addf %5, %6 : vector<16x128xf32>
    %cst_8 = arith.constant 5.000000e-01 : f32
    %8 = vector.broadcast %cst_8 : f32 to vector<16x128xf32>
    %9 = arith.mulf %8, %7 : vector<16x128xf32>
    %cst_9 = arith.constant 4.471500e-02 : f32
    %10 = vector.broadcast %cst_9 : f32 to vector<16x128xf32>
    %11 = arith.mulf %10, %7 : vector<16x128xf32>
    %12 = arith.mulf %11, %7 : vector<16x128xf32>
    %13 = arith.mulf %12, %7 : vector<16x128xf32>
    %14 = arith.addf %7, %13 : vector<16x128xf32>
    %cst_10 = arith.constant 0.797884583 : f32
    %15 = vector.broadcast %cst_10 : f32 to vector<16x128xf32>
    %16 = arith.mulf %15, %14 : vector<16x128xf32>
    %17 = math.tanh %16 : vector<16x128xf32>
    %cst_11 = arith.constant 1.000000e+00 : f32
    %18 = vector.broadcast %cst_11 : f32 to vector<16x128xf32>
    %19 = arith.addf %18, %17 : vector<16x128xf32>
    %20 = arith.mulf %9, %19 : vector<16x128xf32>
    %cst_12 = arith.constant dense<0.000000e+00> : vector<16x32xf32>
    %21 = tpu.matmul %20, %4, %cst_12 {dimension_numbers = #tpu.dot_dimension_numbers<[1], [0], [0], [1], [0, 0, 1, 1], [], []>} : vector<16x128xf32>, vector<128x32xf32>, vector<16x32xf32> -> vector<16x32xf32>
    %22 = arith.addf %1, %21 : vector<16x32xf32>
    %c0_13 = arith.constant 0 : index
    %c0_14 = arith.constant 0 : index
    %23 = vector.load %arg5[%c0_13, %c0_14] : memref<1x32xf32, #tpu.memory_space<vmem>>, vector<1x32xf32>
    %24 = vector.broadcast %23 : vector<1x32xf32> to vector<16x32xf32>
    %25 = arith.addf %22, %24 : vector<16x32xf32>
    %c0_15 = arith.constant 0 : index
    %c0_16 = arith.constant 0 : index
    %26 = vector.load %arg6[%c0_15, %c0_16] : memref<16x32xf32, #tpu.memory_space<vmem>>, vector<16x32xf32>
    tpu.vector_store %arg6[%c0_15, %c0_16], %25 {strides = array<i32>} : memref<16x32xf32, #tpu.memory_space<vmem>>, vector<16x32xf32>,
    return
  }
  func.func @transform_0(%arg0: i32) -> (i32, i32) {
    %c0_i32 = arith.constant 0 : i32
    %c0_i32_0 = arith.constant 0 : i32
    return %arg0, %c0_i32 : i32, i32
  }
  func.func @transform_1(%arg0: i32) -> (i32, i32) {
    %c0_i32 = arith.constant 0 : i32
    %c0_i32_0 = arith.constant 0 : i32
    %c0_i32_1 = arith.constant 0 : i32
    return %c0_i32, %c0_i32_0 : i32, i32
  }
  func.func @transform_2(%arg0: i32) -> (i32, i32) {
    %c0_i32 = arith.constant 0 : i32
    %c0_i32_0 = arith.constant 0 : i32
    %c0_i32_1 = arith.constant 0 : i32
    return %c0_i32, %c0_i32_0 : i32, i32
  }
  func.func @transform_3(%arg0: i32) -> (i32, i32) {
    %c0_i32 = arith.constant 0 : i32
    %c0_i32_0 = arith.constant 0 : i32
    %c0_i32_1 = arith.constant 0 : i32
    return %c0_i32, %c0_i32_0 : i32, i32
  }
  func.func @transform_4(%arg0: i32) -> (i32, i32) {
    %c0_i32 = arith.constant 0 : i32
    %c0_i32_0 = arith.constant 0 : i32
    %c0_i32_1 = arith.constant 0 : i32
    return %c0_i32, %c0_i32_0 : i32, i32
  }
  func.func @transform_5(%arg0: i32) -> (i32, i32) {
    %c0_i32 = arith.constant 0 : i32
    %c0_i32_0 = arith.constant 0 : i32
    return %arg0, %c0_i32 : i32, i32
  }
}

</mosaic_0001>

<llo_original>
// kernel: siglip_mlp.1
$region0: #{siglip_mlp.1}
  #allocation0 [shape = 'u32[]', space=smem, size = 0x4, offset = 0x4, fixed_abs, tag = 'smem constant byte address 0x4 - core index']
  #allocation1 [shape = 'u32[144,128]{1,0:T(1,128)}', space=vmem, size = 0x12000, scoped, tag = 'internal scratch']
  %s0 = inlined_call_operand.vmem [shape: f32[16,32], index: 0, kind: input, shape index: {}]
  %s1 = inlined_call_operand.vmem [shape: f32[32,128], index: 1, kind: input, shape index: {}]
  %s2 = inlined_call_operand.vmem [shape: f32[1,128], index: 2, kind: input, shape index: {}]
  %s3 = inlined_call_operand.vmem [shape: f32[128,32], index: 3, kind: input, shape index: {}]
  %s4 = inlined_call_operand.vmem [shape: f32[1,32], index: 4, kind: input, shape index: {}]
  %s5 = inlined_call_operand.hbm [shape: f32[16,32], index: 5, kind: output, shape index: {}]
  %s6 = sld [smem:[#allocation0]]
  $region30: #{siglip_mlp.1} parent=0
    _
  %s8 = ssub.s32 1, %s6
  %s9 = scalar_select 0, %s8, %s6
  $region1: #{siglip_mlp.1} parent=0
    #allocation2 [shape = 'u8[8192]{0}', space=vmem, size = 0x2000, scoped, tag = 'output window, operand 0, single buffered']
    #allocation3 [shape = 's32[1]{0}', space=sflag, size = 0x4, scoped, tag = 'scoped memory for siglip_mlp.1']
    %10 = vsyncpa [#allocation3], 0
    // Predicated region
    $region2: #{siglip_mlp.1} parent=1 // pred_check
      _
    $region3: #{siglip_mlp.1} parent=1 // pred_check_branch
      %12 = sbr.rel (0) target = $region5
    $region4: #{siglip_mlp.1} parent=1 // pred_region
      _
    $region5: #{siglip_mlp.1} parent=1 // pred_fallthru
      _
    // Predicated region
    $region6: #{siglip_mlp.1} parent=1 // pred_check
      _
    $region7: #{siglip_mlp.1} parent=1 // pred_check_branch
      %14 = sbr.rel (0) target = $region9
    $region8: #{siglip_mlp.1} parent=1 // pred_region
      _
    $region9: #{siglip_mlp.1} parent=1 // pred_fallthru
      _
    // Predicated region
    $region10: #{siglip_mlp.1} parent=1 // pred_check
      _
    $region11: #{siglip_mlp.1} parent=1 // pred_check_branch
      %16 = sbr.rel (0) target = $region13
    $region12: #{siglip_mlp.1} parent=1 // pred_region
      _
    $region13: #{siglip_mlp.1} parent=1 // pred_fallthru
      _
    // Predicated region
    $region14: #{siglip_mlp.1} parent=1 // pred_check
      _
    $region15: #{siglip_mlp.1} parent=1 // pred_check_branch
      %18 = sbr.rel (0) target = $region17
    $region16: #{siglip_mlp.1} parent=1 // pred_region
      _
    $region17: #{siglip_mlp.1} parent=1 // pred_fallthru
      _
    // Predicated region
    $region18: #{siglip_mlp.1} parent=1 // pred_check
      _
    $region19: #{siglip_mlp.1} parent=1 // pred_check_branch
      %20 = sbr.rel (0) target = $region21
    $region20: #{siglip_mlp.1} parent=1 // pred_region
      _
    $region21: #{siglip_mlp.1} parent=1 // pred_fallthru
      _
    %v21 = vld [vmem:[%s0] sm:$0xff]
    %v22 = vld [vmem:[%s0 + $0x8] sm:$0xff]
    %v23 = vld [vmem:[%s1] sm:$0xff]
    %v24 = vld [vmem:[%s1 + $0x8] sm:$0xff]
    %v25 = vld [vmem:[%s1 + $0x10] sm:$0xff]
    %v26 = vld [vmem:[%s1 + $0x18] sm:$0xff]
    %v27 = vld [vmem:[%s2] sm:$0x1]
    %v28 = vld [vmem:[%s3] sm:$0xff]
    %v29 = vld [vmem:[%s3 + $0x8] sm:$0xff]
    %v30 = vld [vmem:[%s3 + $0x10] sm:$0xff]
    %v31 = vld [vmem:[%s3 + $0x18] sm:$0xff]
    %v32 = vld [vmem:[%s3 + $0x20] sm:$0xff]
    %v33 = vld [vmem:[%s3 + $0x28] sm:$0xff]
    %v34 = vld [vmem:[%s3 + $0x30] sm:$0xff]
    %v35 = vld [vmem:[%s3 + $0x38] sm:$0xff]
    %v36 = vld [vmem:[%s3 + $0x40] sm:$0xff]
    %v37 = vld [vmem:[%s3 + $0x48] sm:$0xff]
    %v38 = vld [vmem:[%s3 + $0x50] sm:$0xff]
    %v39 = vld [vmem:[%s3 + $0x58] sm:$0xff]
    %v40 = vld [vmem:[%s3 + $0x60] sm:$0xff]
    %v41 = vld [vmem:[%s3 + $0x68] sm:$0xff]
    %v42 = vld [vmem:[%s3 + $0x70] sm:$0xff]
    %v43 = vld [vmem:[%s3 + $0x78] sm:$0xff]
    %v45 = vlaneseq
    %v46 = vshrl.u32 %v45, 7
    %v47 = vsub.s32 0, %v46
    %v48 = vrot.slane %v27, %v47
    %vm50 = vcmask 261120
    %v52 = vsel %vm50, %v21, 0
    %v55 = vsel %vm50, %v22, 0
    %57 = vmatprep.subr.mxu0 0.0
    %58 = vmatpush1.msra.mxu0 %v23
    %59 = vmatprep.subr.mxu0 0.0
    %60 = vmatpush1.msra.mxu0 %v24
    %61 = vmatprep.subr.mxu0 0.0
    %62 = vmatpush1.msra.mxu0 %v25
    %63 = vmatprep.subr.mxu0 0.0
    %64 = vmatpush1.msra.mxu0 %v26
    %65 = vmatprep.subr.mxu0 0.0
    %66 = vmatpush1.msra.mxu0 0.0
    %67 = vmatprep.subr.mxu0 0.0
    %68 = vmatpush1.msra.mxu0 0.0
    %69 = vmatprep.subr.mxu0 0.0
    %70 = vmatpush1.msra.mxu0 0.0
    %71 = vmatprep.subr.mxu0 0.0
    %72 = vmatpush1.msra.mxu0 0.0
    %73 = vmatprep.subr.mxu0 0.0
    %74 = vmatpush1.msra.mxu0 0.0
    %75 = vmatprep.subr.mxu0 0.0
    %76 = vmatpush1.msra.mxu0 0.0
    %77 = vmatprep.subr.mxu0 0.0
    %78 = vmatpush1.msra.mxu0 0.0
    %79 = vmatprep.subr.mxu0 0.0
    %80 = vmatpush1.msra.mxu0 0.0
    %81 = vmatprep.subr.mxu0 0.0
    %82 = vmatpush1.msra.mxu0 0.0
    %83 = vmatprep.subr.mxu0 0.0
    %84 = vmatpush1.msra.mxu0 0.0
    %85 = vmatprep.subr.mxu0 0.0
    %86 = vmatpush1.msra.mxu0 0.0
    %87 = vmatprep.subr.mxu0 0.0
    %88 = vmatpush1.msra.mxu0 0.0
    %89 = vmatprep.subr.mxu0 0.0
    %90 = vmatpush1.msra.mxu0 0.0
    %91 = vmatprep.subr.mxu0 0.0
    %92 = vmatpush1.msra.mxu0 0.0
    %93 = vmatprep.subr.mxu0 0.0
    %94 = vmatpush1.msra.mxu0 0.0
    %95 = vmatprep.subr.mxu0 0.0
    %96 = vmatpush1.msra.mxu0 0.0
    %97 = vmatprep.subr.mxu0 0.0
    %98 = vmatpush1.msra.mxu0 0.0
    %99 = vmatprep.subr.mxu0 0.0
    %100 = vmatpush1.msra.mxu0 0.0
    %101 = vmatprep.subr.mxu0 0.0
    %102 = vmatpush1.msra.mxu0 0.0
    %103 = vmatprep.subr.mxu0 0.0
    %104 = vmatpush1.msra.mxu0 0.0
    %105 = vmatprep.subr.mxu0 0.0
    %106 = vmatpush1.msra.mxu0 0.0
    %107 = vmatprep.subr.mxu0 0.0
    %108 = vmatpush1.msra.mxu0 0.0
    %109 = vmatprep.subr.mxu0 0.0
    %110 = vmatpush1.msra.mxu0 0.0
    %111 = vmatprep.subr.mxu0 0.0
    %112 = vmatpush1.msra.mxu0 0.0
    %113 = vmatprep.subr.mxu0 0.0
    %114 = vmatpush1.msra.mxu0 0.0
    %115 = vmatprep.subr.mxu0 0.0
    %116 = vmatpush1.msra.mxu0 0.0
    %117 = vmatprep.subr.mxu0 0.0
    %118 = vmatpush1.msra.mxu0 0.0
    %119 = vmatprep.subr.mxu0 0.0
    %120 = vmatpush1.msra.mxu0 0.0
    %121 = vmatprep.mubr.f32.mxu0 0.0
    %122 = vmatmul.mubr.f32.gmra.mrb[0].mxu0 %v52
    %v123 = vpop.f32.mrb[0].mxu0
    %v124 = vadd.f32 %v48, %v123
    %v125 = vpop.f32.mrb[0].mxu0
    %126 = vmatprep.mubr.f32.mxu0 0.0
    %127 = vmatmul.mubr.f32.gmra.mrb[0].mxu0 %v55
    %v128 = vpop.f32.mrb[0].mxu0
    %v129 = vadd.f32 %v48, %v128
    %v130 = vpop.f32.mrb[0].mxu0
    %131 = vdwg.mxu0
    %v132 = vmul.f32 %v124, 0.5
    %v133 = vmul.f32 %v129, 0.5
    %v134 = vmul.f32 %v124, 0.044715
    %v135 = vmul.f32 %v129, 0.044715
    %v136 = vmul.f32 %v134, %v124
    %v137 = vmul.f32 %v135, %v129
    %v138 = vmul.f32 %v136, %v124
    %v139 = vmul.f32 %v137, %v129
    %v140 = vadd.f32 %v124, %v138
    %v141 = vadd.f32 %v129, %v139
    %v142 = vmul.f32 %v140, 0.7978846
    %v143 = vmul.f32 %v141, 0.7978846
    %v144 = vtanh.pop %v142
    %v145 = vtanh.pop %v143
    %v146 = vadd.f32 %v144, 1.0
    %v147 = vadd.f32 %v145, 1.0
    %v148 = vmul.f32 %v132, %v146
    %v149 = vmul.f32 %v133, %v147
    %v150 = vld [vmem:[%s4] sm:$0x1]
    %v152 = vlaneseq
    %v153 = vshrl.u32 %v152, 7
    %v154 = vsub.s32 0, %v153
    %v155 = vrot.slane %v150, %v154
    %157 = vmatprep.subr.mxu0 0.0
    %158 = vmatpush1.msra.mxu0 %v28
    %159 = vmatprep.subr.mxu0 0.0
    %160 = vmatpush1.msra.mxu0 %v29
    %161 = vmatprep.subr.mxu0 0.0
    %162 = vmatpush1.msra.mxu0 %v30
    %163 = vmatprep.subr.mxu0 0.0
    %164 = vmatpush1.msra.mxu0 %v31
    %165 = vmatprep.subr.mxu0 0.0
    %166 = vmatpush1.msra.mxu0 %v32
    %167 = vmatprep.subr.mxu0 0.0
    %168 = vmatpush1.msra.mxu0 %v33
    %169 = vmatprep.subr.mxu0 0.0
    %170 = vmatpush1.msra.mxu0 %v34
    %171 = vmatprep.subr.mxu0 0.0
    %172 = vmatpush1.msra.mxu0 %v35
    %173 = vmatprep.subr.mxu0 0.0
    %174 = vmatpush1.msra.mxu0 %v36
    %175 = vmatprep.subr.mxu0 0.0
    %176 = vmatpush1.msra.mxu0 %v37
    %177 = vmatprep.subr.mxu0 0.0
    %178 = vmatpush1.msra.mxu0 %v38
    %179 = vmatprep.subr.mxu0 0.0
    %180 = vmatpush1.msra.mxu0 %v39
    %181 = vmatprep.subr.mxu0 0.0
    %182 = vmatpush1.msra.mxu0 %v40
    %183 = vmatprep.subr.mxu0 0.0
    %184 = vmatpush1.msra.mxu0 %v41
    %185 = vmatprep.subr.mxu0 0.0
    %186 = vmatpush1.msra.mxu0 %v42
    %187 = vmatprep.subr.mxu0 0.0
    %188 = vmatpush1.msra.mxu0 %v43
    %189 = vmatprep.subr.mxu0 0.0
    %190 = vmatpush1.msra.mxu0 0.0
    %191 = vmatprep.subr.mxu0 0.0
    %192 = vmatpush1.msra.mxu0 0.0
    %193 = vmatprep.subr.mxu0 0.0
    %194 = vmatpush1.msra.mxu0 0.0
    %195 = vmatprep.subr.mxu0 0.0
    %196 = vmatpush1.msra.mxu0 0.0
    %197 = vmatprep.subr.mxu0 0.0
    %198 = vmatpush1.msra.mxu0 0.0
    %199 = vmatprep.subr.mxu0 0.0
    %200 = vmatpush1.msra.mxu0 0.0
    %201 = vmatprep.subr.mxu0 0.0
    %202 = vmatpush1.msra.mxu0 0.0
    %203 = vmatprep.subr.mxu0 0.0
    %204 = vmatpush1.msra.mxu0 0.0
    %205 = vmatprep.subr.mxu0 0.0
    %206 = vmatpush1.msra.mxu0 0.0
    %207 = vmatprep.subr.mxu0 0.0
    %208 = vmatpush1.msra.mxu0 0.0
    %209 = vmatprep.subr.mxu0 0.0
    %210 = vmatpush1.msra.mxu0 0.0
    %211 = vmatprep.subr.mxu0 0.0
    %212 = vmatpush1.msra.mxu0 0.0
    %213 = vmatprep.subr.mxu0 0.0
    %214 = vmatpush1.msra.mxu0 0.0
    %215 = vmatprep.subr.mxu0 0.0
    %216 = vmatpush1.msra.mxu0 0.0
    %217 = vmatprep.subr.mxu0 0.0
    %218 = vmatpush1.msra.mxu0 0.0
    %219 = vmatprep.subr.mxu0 0.0
    %220 = vmatpush1.msra.mxu0 0.0
    %221 = vmatprep.mubr.f32.mxu0 0.0
    %222 = vmatmul.mubr.f32.gmra.mrb[0].mxu0 %v148
    %v223 = vpop.f32.mrb[0].mxu0
    %v224 = vadd.f32 %v155, %v223
    %v225 = vpop.f32.mrb[0].mxu0
    %226 = vmatprep.mubr.f32.mxu0 0.0
    %227 = vmatmul.mubr.f32.gmra.mrb[0].mxu0 %v149
    %v228 = vpop.f32.mrb[0].mxu0
    %v229 = vadd.f32 %v155, %v228
    %v230 = vpop.f32.mrb[0].mxu0
    %231 = vdwg.mxu0
    %232 = vst.msk [vmem:[#allocation2] sm:$0xff] %vm50, %v224
    %233 = vst.msk [vmem:[#allocation2 + $0x8] sm:$0xff] %vm50, %v229
    // Predicated region
    $region22: #{siglip_mlp.1} parent=1 // pred_check
      _
    $region23: #{siglip_mlp.1} parent=1 // pred_check_branch
      %235 = sbr.rel (0) target = $region25
    $region24: #{siglip_mlp.1} parent=1 // pred_region
      %s237 = ssub.s32 256, 256
      %238 = vsyncadd [#allocation3], %s237
      %s239 = sshll.u32 [#allocation2], 4
      %s240 = int_to_ptr.vmem [resolvable:$true] %s239
      %245 = dma.vmem_to_hbm [thread:$0]  %s240, 256, %s5, [#allocation3], 128, 128, 8
    $region25: #{siglip_mlp.1} parent=1 // pred_fallthru
      _
    // Predicated region
    $region26: #{siglip_mlp.1} parent=1 // pred_check
      _
    $region27: #{siglip_mlp.1} parent=1 // pred_check_branch
      %247 = sbr.rel (0) target = $region29
    $region28: #{siglip_mlp.1} parent=1 // pred_region
      %248 = dma.done [#allocation3], 256
    $region29: #{siglip_mlp.1} parent=1 // pred_fallthru
      _
    %249 = vsyncpa [#allocation3], 1

</llo_original>
